<compile_context>
chip_gen: v7x
topology: tpu7x:2x2x1
jax: 0.10.0
libtpu: 0.0.40
codegen_flags: <defaults>
</compile_context>

<pallas_src>
from functools import partial

import jax
import jax.numpy as jnp
from jax import lax
from jax.experimental import pallas as pl
from jax.experimental.pallas import tpu as pltpu

IN_FEATURES = 5
HIDDEN = 10
OUT_FEATURES = 5


def _round_up(n: int, m: int) -> int:
    return ((n + m - 1) // m) * m


def _fused_affine_kernel(x_ref, w_ref, b_ref, o_ref):
    """o = W_fused @ x^T + b, lane-dense (feature-major) output.

    x_ref: (TB, IN)   natural-layout input block (caller's dtype)
    w_ref: (OUT, IN)  fused weight (= W2 @ W1), resident across grid steps
    b_ref: (OUT, 1)   fused bias column (f32)
    o_ref: (OUT, TB)  output block — lane-dense stores (no masked vst.msk)
    """
    # Contract IN on the last dim of BOTH operands: (OUT,IN) x (TB,IN) -> (OUT,TB).
    s = lax.dot_general(
        w_ref[...], x_ref[...],
        dimension_numbers=(((1,), (1,)), ((), ())),
        preferred_element_type=jnp.float32)
    o_ref[...] = (s + b_ref[...]).astype(o_ref.dtype)


@partial(jax.jit, static_argnames=("block_b", "single_block_max"))
def net1_forward(x, w1, b1, w2, b2, *, block_b=16384, single_block_max=4096):
    """Forward of _Net1.

    x : (B, 5)
    w1: (10, 5), b1: (10,)  -- PyTorch Linear(5, 10) layout (out, in)
    w2: (5, 10), b2: (5,)   -- PyTorch Linear(10, 5) layout (out, in)
    """
    if x.ndim != 2 or x.shape[1] != IN_FEATURES:
        raise ValueError(f"expected x of shape (B, {IN_FEATURES}), got {x.shape}")
    batch = x.shape[0]
    out_dtype = x.dtype
    itemsize = jnp.dtype(out_dtype).itemsize

    # Fuse the two affine layers (no activation in between). Fusion done in f32,
    # the tiny weight is then kept in the activation dtype (native MXU path).
    w_fused = (w2.astype(jnp.float32) @ w1.astype(jnp.float32)).astype(out_dtype)
    b_fused = (b1.astype(jnp.float32) @ w2.astype(jnp.float32).T
               + b2.astype(jnp.float32)).reshape(OUT_FEATURES, 1)

    cost = pl.CostEstimate(
        flops=2 * batch * IN_FEATURES * OUT_FEATURES,
        transcendentals=0,
        bytes_accessed=(batch * IN_FEATURES + batch * OUT_FEATURES) * itemsize
        + OUT_FEATURES * IN_FEATURES * itemsize + OUT_FEATURES * 4,
    )

    if batch <= single_block_max:
        # Single block: no grid loop at all; everything lives in VMEM.
        y_t = pl.pallas_call(
            _fused_affine_kernel,
            out_shape=jax.ShapeDtypeStruct((OUT_FEATURES, batch), out_dtype),
            in_specs=[
                pl.BlockSpec(memory_space=pltpu.MemorySpace.VMEM),
                pl.BlockSpec(memory_space=pltpu.MemorySpace.VMEM),
                pl.BlockSpec(memory_space=pltpu.MemorySpace.VMEM),
            ],
            out_specs=pl.BlockSpec(memory_space=pltpu.MemorySpace.VMEM),
            cost_estimate=cost,
        )(x, w_fused, b_fused)
        return y_t.T  # one transpose on the output only (fused by XLA under jit)

    # Tiled path: stream the batch axis; the output lane dim must be a multiple
    # of 128, so round block_b up. Cap it so large batches get >= 2 grid steps
    # (lets v7x split the "parallel" axis over both TensorCores).
    bb = _round_up(max(block_b, 128), 128)
    bb = min(bb, _round_up(pl.cdiv(batch, 2), 128))
    grid = (pl.cdiv(batch, bb),)  # ragged last block clamped/masked by Pallas

    y_t = pl.pallas_call(
        _fused_affine_kernel,
        out_shape=jax.ShapeDtypeStruct((OUT_FEATURES, batch), out_dtype),
        grid=grid,
        in_specs=[
            pl.BlockSpec((bb, IN_FEATURES), lambda i: (i, 0)),          # x, natural layout
            pl.BlockSpec((OUT_FEATURES, IN_FEATURES), lambda i: (0, 0)),  # resident weight
            pl.BlockSpec((OUT_FEATURES, 1), lambda i: (0, 0)),            # resident bias
        ],
        out_specs=pl.BlockSpec((OUT_FEATURES, bb), lambda i: (0, i)),     # lane-dense stores
        compiler_params=pltpu.CompilerParams(
            dimension_semantics=("parallel",),      # independent batch blocks
            vmem_limit_bytes=32 * 1024 * 1024,      # fits v5e/v6e/v7x scoped VMEM
        ),
        cost_estimate=cost,
    )(x, w_fused, b_fused)
    return y_t.T  # single wrapper transpose on the (OUT, B) result


def init_params(key):
    """Deterministic params mimicking torch.nn.Linear init (uniform +-1/sqrt(fan_in))."""
    k1, k2, k3, k4 = jax.random.split(key, 4)
    bound1 = 1.0 / jnp.sqrt(IN_FEATURES)
    bound2 = 1.0 / jnp.sqrt(HIDDEN)
    # PyTorch stores weight as (out, in); kept here and fused in the wrapper.
    w1 = jax.random.uniform(k1, (HIDDEN, IN_FEATURES), jnp.float32, -bound1, bound1)
    b1 = jax.random.uniform(k2, (HIDDEN,), jnp.float32, -bound1, bound1)
    w2 = jax.random.uniform(k3, (OUT_FEATURES, HIDDEN), jnp.float32, -bound2, bound2)
    b2 = jax.random.uniform(k4, (OUT_FEATURES,), jnp.float32, -bound2, bound2)
    return w1, b1, w2, b2


def _reference(x, w1, b1, w2, b2):
    # Plain-JAX equivalent of torch's linear_2(linear_1(x)).
    return (x @ w1.T + b1) @ w2.T + b2


if __name__ == "__main__":
    key = jax.random.PRNGKey(0)
    kx1, kx2, kp = jax.random.split(key, 3)
    w1, b1, w2, b2 = init_params(kp)

    ok = True

    # Small batch -> single-block (no-grid) path.
    x_small = jax.random.normal(kx1, (8, IN_FEATURES), jnp.float32)
    y_small = jax.block_until_ready(net1_forward(x_small, w1, b1, w2, b2))
    ok &= y_small.shape == (8, OUT_FEATURES)
    ok &= bool(jnp.allclose(y_small, _reference(x_small, w1, b1, w2, b2),
                            atol=1e-4, rtol=1e-4))

    # Modest batch -> tiled lane-dense path (3 grid steps, ragged final block).
    x_big = jax.random.normal(kx2, (640, IN_FEATURES), jnp.float32)
    y_big = jax.block_until_ready(
        net1_forward(x_big, w1, b1, w2, b2, block_b=256, single_block_max=128))
    ok &= y_big.shape == (640, OUT_FEATURES)
    ok &= bool(jnp.allclose(y_big, _reference(x_big, w1, b1, w2, b2),
                            atol=1e-4, rtol=1e-4))

    if not ok:
        raise SystemExit("Pallas kernel output does not match reference")
    print("KERNEL_OK")
</pallas_src>

<mosaic_0001>
module attributes {stable_mosaic.version = 11 : i64} {
  func.func @_fused_affine_kernel(%arg0: memref<8x5xf32, #tpu.memory_space<vmem>>, %arg1: memref<5x5xf32, #tpu.memory_space<vmem>>, %arg2: memref<5x1xf32, #tpu.memory_space<vmem>>, %arg3: memref<5x8xf32, #tpu.memory_space<vmem>>) attributes {dimension_semantics = [], scalar_prefetch = 0 : i64, scratch_operands = 0 : i64, tpu.core_type = #tpu.core_type<tc>} {
    %c0 = arith.constant 0 : index
    %c0_0 = arith.constant 0 : index
    %0 = vector.load %arg1[%c0, %c0_0] : memref<5x5xf32, #tpu.memory_space<vmem>>, vector<5x5xf32>
    %c0_1 = arith.constant 0 : index
    %c0_2 = arith.constant 0 : index
    %1 = vector.load %arg0[%c0_1, %c0_2] : memref<8x5xf32, #tpu.memory_space<vmem>>, vector<8x5xf32>
    %cst = arith.constant dense<0.000000e+00> : vector<5x8xf32>
    %2 = tpu.matmul %0, %1, %cst {dimension_numbers = #tpu.dot_dimension_numbers<[1], [1], [0], [0], [0, 0, 1, 0], [], []>} : vector<5x5xf32>, vector<8x5xf32>, vector<5x8xf32> -> vector<5x8xf32>
    %c0_3 = arith.constant 0 : index
    %c0_4 = arith.constant 0 : index
    %3 = vector.load %arg2[%c0_3, %c0_4] : memref<5x1xf32, #tpu.memory_space<vmem>>, vector<5x1xf32>
    %4 = vector.broadcast %3 : vector<5x1xf32> to vector<5x8xf32>
    %5 = arith.addf %2, %4 : vector<5x8xf32>
    %c0_5 = arith.constant 0 : index
    %c0_6 = arith.constant 0 : index
    %6 = vector.load %arg3[%c0_5, %c0_6] : memref<5x8xf32, #tpu.memory_space<vmem>>, vector<5x8xf32>
    tpu.vector_store %arg3[%c0_5, %c0_6], %5 {strides = array<i32>} : memref<5x8xf32, #tpu.memory_space<vmem>>, vector<5x8xf32>,
    return
  }
}

</mosaic_0001>

<llo_original>
// kernel: net1_forward.1
$region0: #{net1_forward.1}
  #allocation0 [shape = 'u32[]', space=smem, size = 0x4, offset = 0x4, fixed_abs, tag = 'smem constant byte address 0x4 - core index']
  #allocation1 [shape = 'u32[144,128]{1,0:T(1,128)}', space=vmem, size = 0x12000, scoped, tag = 'internal scratch']
  %s0 = inlined_call_operand.vmem [shape: f32[8,5], index: 0, kind: input, shape index: {}]
  %s1 = inlined_call_operand.vmem [shape: f32[5,5], index: 1, kind: input, shape index: {}]
  %s2 = inlined_call_operand.vmem [shape: f32[5,1], index: 2, kind: input, shape index: {}]
  %s3 = inlined_call_operand.vmem [shape: f32[5,8], index: 3, kind: output, shape index: {}]
  %s4 = sld [smem:[#allocation0]]
  $region22: #{net1_forward.1} parent=0
    _
  %s6 = ssub.s32 1, %s4
  %s7 = scalar_select 0, %s6, %s4
  // Predicated region
  $region2: #{net1_forward.1} parent=0 // pred_check
    _
  $region3: #{net1_forward.1} parent=0 // pred_check_branch
    %9 = sbr.rel (0) target = $region5
  $region4: #{net1_forward.1} parent=0 // pred_region
    _
  $region5: #{net1_forward.1} parent=0 // pred_fallthru
    _
  // Predicated region
  $region6: #{net1_forward.1} parent=0 // pred_check
    _
  $region7: #{net1_forward.1} parent=0 // pred_check_branch
    %11 = sbr.rel (0) target = $region9
  $region8: #{net1_forward.1} parent=0 // pred_region
    _
  $region9: #{net1_forward.1} parent=0 // pred_fallthru
    _
  // Predicated region
  $region10: #{net1_forward.1} parent=0 // pred_check
    _
  $region11: #{net1_forward.1} parent=0 // pred_check_branch
    %13 = sbr.rel (0) target = $region13
  $region12: #{net1_forward.1} parent=0 // pred_region
    _
  $region13: #{net1_forward.1} parent=0 // pred_fallthru
    _
  %v14 = vld [vmem:[%s1] sm:$0x1f]
  %v15 = vld [vmem:[%s0] sm:$0xff]
  %v16 = vld [vmem:[%s2] sm:$0x1f]
  %18 = vset.pattern.permute.xlu0 0
  %19 = vperm.xlu0 %18, %v16
  %v20 = vpop.permute.xlu0 %19
  %vm22 = vcmask 39936
  %v24 = vsel %vm22, %v14, 0
  %v27 = vsel %vm22, %v15, 0
  %29 = vmatprep.subr.mxu0 0.0
  %30 = vmatpush1.xpose.msra.mxu0 %v27
  %31 = vmatprep.subr.mxu0 0.0
  %32 = vmatpush1.xpose.msra.mxu0 0.0
  %33 = vmatprep.subr.mxu0 0.0
  %34 = vmatpush1.xpose.msra.mxu0 0.0
  %35 = vmatprep.subr.mxu0 0.0
  %36 = vmatpush1.xpose.msra.mxu0 0.0
  %37 = vmatprep.subr.mxu0 0.0
  %38 = vmatpush1.xpose.msra.mxu0 0.0
  %39 = vmatprep.subr.mxu0 0.0
  %40 = vmatpush1.xpose.msra.mxu0 0.0
  %41 = vmatprep.subr.mxu0 0.0
  %42 = vmatpush1.xpose.msra.mxu0 0.0
  %43 = vmatprep.subr.mxu0 0.0
  %44 = vmatpush1.xpose.msra.mxu0 0.0
  %45 = vmatprep.subr.mxu0 0.0
  %46 = vmatpush1.xpose.msra.mxu0 0.0
  %47 = vmatprep.subr.mxu0 0.0
  %48 = vmatpush1.xpose.msra.mxu0 0.0
  %49 = vmatprep.subr.mxu0 0.0
  %50 = vmatpush1.xpose.msra.mxu0 0.0
  %51 = vmatprep.subr.mxu0 0.0
  %52 = vmatpush1.xpose.msra.mxu0 0.0
  %53 = vmatprep.subr.mxu0 0.0
  %54 = vmatpush1.xpose.msra.mxu0 0.0
  %55 = vmatprep.subr.mxu0 0.0
  %56 = vmatpush1.xpose.msra.mxu0 0.0
  %57 = vmatprep.subr.mxu0 0.0
  %58 = vmatpush1.xpose.msra.mxu0 0.0
  %59 = vmatprep.subr.mxu0 0.0
  %60 = vmatpush1.xpose.msra.mxu0 0.0
  %61 = vmatprep.subr.mxu0 0.0
  %62 = vmatpush1.xpose.msra.mxu0 0.0
  %63 = vmatprep.subr.mxu0 0.0
  %64 = vmatpush1.xpose.msra.mxu0 0.0
  %65 = vmatprep.subr.mxu0 0.0
  %66 = vmatpush1.xpose.msra.mxu0 0.0
  %67 = vmatprep.subr.mxu0 0.0
  %68 = vmatpush1.xpose.msra.mxu0 0.0
  %69 = vmatprep.subr.mxu0 0.0
  %70 = vmatpush1.xpose.msra.mxu0 0.0
  %71 = vmatprep.subr.mxu0 0.0
  %72 = vmatpush1.xpose.msra.mxu0 0.0
  %73 = vmatprep.subr.mxu0 0.0
  %74 = vmatpush1.xpose.msra.mxu0 0.0
  %75 = vmatprep.subr.mxu0 0.0
  %76 = vmatpush1.xpose.msra.mxu0 0.0
  %77 = vmatprep.subr.mxu0 0.0
  %78 = vmatpush1.xpose.msra.mxu0 0.0
  %79 = vmatprep.subr.mxu0 0.0
  %80 = vmatpush1.xpose.msra.mxu0 0.0
  %81 = vmatprep.subr.mxu0 0.0
  %82 = vmatpush1.xpose.msra.mxu0 0.0
  %83 = vmatprep.subr.mxu0 0.0
  %84 = vmatpush1.xpose.msra.mxu0 0.0
  %85 = vmatprep.subr.mxu0 0.0
  %86 = vmatpush1.xpose.msra.mxu0 0.0
  %87 = vmatprep.subr.mxu0 0.0
  %88 = vmatpush1.xpose.msra.mxu0 0.0
  %89 = vmatprep.subr.mxu0 0.0
  %90 = vmatpush1.xpose.msra.mxu0 0.0
  %91 = vmatprep.subr.mxu0 0.0
  %92 = vmatpush1.xpose.msra.mxu0 0.0
  %93 = vmatprep.mubr.f32.mxu0 0.0
  %94 = vmatmul.mubr.f32.gmra.mrb[0].mxu0 %v24
  %v95 = vpop.f32.mrb[0].mxu0
  %v96 = vadd.f32 %v20, %v95
  %v97 = vpop.f32.mrb[0].mxu0
  %98 = vdwg.mxu0
  %vm99 = vcmask 61440
  %100 = vst.msk [vmem:[%s3] sm:$0x1f] %vm99, %v96
  // Predicated region
  $region14: #{net1_forward.1} parent=0 // pred_check
    _
  $region15: #{net1_forward.1} parent=0 // pred_check_branch
    %102 = sbr.rel (0) target = $region17
  $region16: #{net1_forward.1} parent=0 // pred_region
    _
  $region17: #{net1_forward.1} parent=0 // pred_fallthru
    _
  // Predicated region
  $region18: #{net1_forward.1} parent=0 // pred_check
    _
  $region19: #{net1_forward.1} parent=0 // pred_check_branch
    %104 = sbr.rel (0) target = $region21
  $region20: #{net1_forward.1} parent=0 // pred_region
    _
  $region21: #{net1_forward.1} parent=0 // pred_fallthru
    _

</llo_original>
